<compile_context>
chip_gen: v6e
topology: v6e:2x2x1
jax: 0.10.0
libtpu: 0.0.40
codegen_flags: <defaults>
</compile_context>

<pallas_src>
import math

import jax
import jax.numpy as jnp
from jax import lax
from jax.experimental import pallas as pl
from jax.experimental.pallas import tpu as pltpu

_LANE = 128
_SUBLANE = 8
_CHUNK_ROWS = 256          # in-kernel row-chunk: bounds live f32 temporaries
_MIN_SPLIT_ROWS = 64       # enough rows to give both v7x TensorCores a block


def _round_up(x, m):
    return -(-x // m) * m


def _target_tile_rows():
    """Rows per grid block (per f32 input: tile_rows * 128 * 4 bytes)."""
    # v5e/v6e: 2048 rows (1 MiB/input) is already past the HBM-roofline knee.
    # v7x: HBM is ~2.3x faster, so the ~0.35us fixed grid-step overhead is a
    # larger fraction -> 4096 rows (2 MiB/input). Budget: 3 inputs x 2
    # buffers x 2 MiB = 12 MiB, well under the 32 MiB scoped-VMEM limit.
    try:
        cap = getattr(pltpu.get_tpu_info(), "vmem_capacity_bytes", None)
        if cap is not None and cap <= 64 * 1024 * 1024:   # v7x (64 MiB physical)
            return 4096
    except Exception:
        pass
    return 2048


def _make_partials_kernel(has_mask, tile_rows, tail_rows, num_blocks):
    """Kernel emitting per-block (1,128) partial sums (sse, sae[, msum])."""
    ragged = tail_rows < tile_rows

    if tile_rows % _CHUNK_ROWS == 0 and tile_rows > _CHUNK_ROWS:
        chunk = _CHUNK_ROWS
    else:
        chunk = tile_rows
    n_chunks = tile_rows // chunk

    def _fold(x):
        # (r, 128) -> (8, 128) via pure VPU vreg adds when r is a multiple of 8.
        r = x.shape[0]
        if r % _SUBLANE == 0 and r > _SUBLANE:
            return jnp.sum(x.reshape(r // _SUBLANE, _SUBLANE, _LANE), axis=0)
        return x

    def _to_row(x):
        # Final cross-sublane reduce -> (1, 128). XLU slot is idle here: free.
        return jnp.sum(x, axis=0, keepdims=True) if x.shape[0] > 1 else x

    def _chunk_partials(p_ref, t_ref, m_ref, start, valid_rows):
        p = p_ref[pl.ds(start, chunk), :].astype(jnp.float32)
        t = t_ref[pl.ds(start, chunk), :].astype(jnp.float32)
        d = p - t
        m = m_ref[pl.ds(start, chunk), :].astype(jnp.float32) if has_mask else None
        if valid_rows is not None:
            # Ragged last block: rows >= valid_rows are garbage (possibly
            # NaN/Inf) from the out-of-bounds window -> mask with a select.
            rid = lax.broadcasted_iota(jnp.int32, (chunk, 1), 0) + start
            ok = rid < valid_rows
            d = jnp.where(ok, d, 0.0)
            if has_mask:
                m = jnp.where(ok, m, 0.0)
        if has_mask:
            dm = d * m                     # mask assumed >= 0: |d|*m == |d*m|
            return _fold(d * dm), _fold(jnp.abs(dm)), _fold(m)
        return _fold(d * d), _fold(jnp.abs(d)), None

    def _block_partials(p_ref, t_ref, m_ref, valid_rows):
        if n_chunks == 1:
            sse, sae, ms = _chunk_partials(p_ref, t_ref, m_ref, 0, valid_rows)
        else:
            n_carry = 3 if has_mask else 2
            init = tuple(jnp.zeros((_SUBLANE, _LANE), jnp.float32)
                         for _ in range(n_carry))

            def body(i, carry):
                start = pl.multiple_of(i * chunk, chunk)
                parts = _chunk_partials(p_ref, t_ref, m_ref, start, valid_rows)
                return tuple(c + q for c, q in zip(carry, parts[:n_carry]))

            carry = lax.fori_loop(0, n_chunks, body, init, unroll=True)
            if has_mask:
                sse, sae, ms = carry
            else:
                (sse, sae), ms = carry, None
        return _to_row(sse), _to_row(sae), (None if ms is None else _to_row(ms))

    def kernel(*refs):
        if has_mask:
            p_ref, t_ref, m_ref, sse_ref, sae_ref, msum_ref = refs
        else:
            p_ref, t_ref, sse_ref, sae_ref = refs
            m_ref = msum_ref = None

        def emit(valid_rows):
            sse, sae, ms = _block_partials(p_ref, t_ref, m_ref, valid_rows)
            sse_ref[...] = sse
            sae_ref[...] = sae
            if has_mask:
                msum_ref[...] = ms

        if not ragged:
            emit(None)
        elif num_blocks == 1:
            emit(tail_rows)
        else:
            last = num_blocks - 1

            @pl.when(pl.program_id(0) != last)
            def _():
                emit(None)                 # hot path: no tail masking at all

            @pl.when(pl.program_id(0) == last)
            def _():
                emit(tail_rows)            # cold path: mask garbage tail rows

    return kernel


def combined_loss(preds, targets, weights=None, mask=None):
    """Weighted sum of masked-MSE and masked-L1 (CombinedLoss.forward).

    preds/targets: same-shaped float arrays (e.g. NCHW).
    weights: length-2 sequence of python floats (defaults to [1.0, 1.0]).
    mask: optional same-shaped array (bool / int8 / float, values >= 0);
          None -> all elements valid. Returns a float32 scalar.
    """
    assert preds.shape == targets.shape
    if weights is None:
        weights = [1.0, 1.0]
    assert len(weights) == 2
    w0, w1 = float(weights[0]), float(weights[1])

    total = math.prod(preds.shape)
    rows = -(-total // _LANE)
    rem = total % _LANE
    pad = (_LANE - rem) if rem else 0      # rare, < 128 zero elements appended

    def _to_slab(x):
        xf = x.reshape(-1)
        if pad:
            xf = jnp.pad(xf, (0, pad))     # zeros contribute nothing
        return xf.reshape(rows, _LANE)

    target = _target_tile_rows()
    if rows > target:
        tile_rows = target
    elif rows >= _MIN_SPLIT_ROWS:
        # Split small-ish inputs into (>=) 2 blocks so both v7x TensorCores
        # get work ("parallel" grid axis). Neutral on v5e/v6e.
        tile_rows = _round_up(-(-rows // 2), 32)
    else:
        tile_rows = rows                   # single block == full array dims
    num_blocks = -(-rows // tile_rows)
    tail_rows = rows - (num_blocks - 1) * tile_rows

    in_arrays = [_to_slab(preds), _to_slab(targets)]
    in_specs = [
        pl.BlockSpec((tile_rows, _LANE), lambda i: (i, 0)),
        pl.BlockSpec((tile_rows, _LANE), lambda i: (i, 0)),
    ]

    has_mask = mask is not None
    if has_mask:
        assert mask.shape == preds.shape
        m = mask
        if m.dtype == jnp.bool_:
            # TODO(synk): stream the bool mask directly once i1 pallas inputs
            # are guaranteed; under jit this convert fuses with the mask's
            # producer so it normally adds no extra HBM traffic.
            m = m.astype(jnp.int8)
        in_arrays.append(_to_slab(m))
        in_specs.append(pl.BlockSpec((tile_rows, _LANE), lambda i: (i, 0)))

    n_out = 3 if has_mask else 2
    out_shape = tuple(jax.ShapeDtypeStruct((num_blocks, 1, _LANE), jnp.float32)
                      for _ in range(n_out))
    out_specs = tuple(pl.BlockSpec((None, 1, _LANE), lambda i: (i, 0, 0))
                      for _ in range(n_out))

    kernel = _make_partials_kernel(has_mask, tile_rows, tail_rows, num_blocks)

    partials = pl.pallas_call(
        kernel,
        grid=(num_blocks,),
        in_specs=in_specs,
        out_specs=out_specs,
        out_shape=out_shape,
        compiler_params=pltpu.CompilerParams(
            dimension_semantics=("parallel",),          # each block owns its output
            vmem_limit_bytes=32 * 1024 * 1024),         # needed on v5e (16 MiB default)
    )(*in_arrays)

    # Tiny final reductions + weighted combine (off the hot path).
    if has_mask:
        sse_p, sae_p, msum_p = partials
        msum = jnp.sum(msum_p)
    else:
        sse_p, sae_p = partials
        msum = jnp.float32(total)          # compile-time count: no ones-mask traffic

    # NOTE: an all-zero mask yields inf/NaN, matching the reference semantics.
    inv = 1.0 / msum
    mse = jnp.sum(sse_p) * inv
    l1 = jnp.sum(sae_p) * inv
    return jnp.float32(w0) * mse + jnp.float32(w1) * l1


def _reference_combined_loss(preds, targets, weights, mask=None):
    # Pure-JAX reference mirroring the PyTorch forward semantics.
    if mask is None:
        mask = jnp.ones(preds.shape, dtype=jnp.float32)
    p = preds.astype(jnp.float32)
    t = targets.astype(jnp.float32)
    m = mask.astype(jnp.float32)
    d = p - t
    msum = jnp.sum(m)
    mse = jnp.sum(d * d * m) / msum
    l1 = jnp.sum(jnp.abs(d) * m) / msum
    agg = jnp.asarray(0.0, jnp.float32)
    for w_, l_ in zip(weights, (mse, l1)):
        agg = agg + jnp.float32(w_) * l_
    return agg


if __name__ == "__main__":
    weights = [0.7, 0.3]                    # deterministic loss weights (module __init__)
    key = jax.random.PRNGKey(0)
    ks = jax.random.split(key, 9)

    def check(preds, targets, mask):
        if mask is not None:
            fn = jax.jit(lambda p, t, m: combined_loss(p, t, weights, m))
            out = fn(preds, targets, mask)
        else:
            fn = jax.jit(lambda p, t: combined_loss(p, t, weights, None))
            out = fn(preds, targets)
        out = jax.block_until_ready(out)
        ref = _reference_combined_loss(preds, targets, weights, mask)
        assert jnp.allclose(out, ref, rtol=1e-5, atol=1e-5), (out, ref)

    # Primary small NCHW shape: batch=2, channels=4, 16x16 (bool mask + no mask).
    p0 = jax.random.normal(ks[0], (2, 4, 16, 16), jnp.float32)
    t0 = jax.random.normal(ks[1], (2, 4, 16, 16), jnp.float32)
    m0 = jax.random.uniform(ks[2], (2, 4, 16, 16)) > 0.3
    check(p0, t0, m0)
    check(p0, t0, None)

    # Ragged final grid block (rows not a multiple of tile_rows), int8 mask.
    p1 = jax.random.normal(ks[3], (2, 4, 40, 40), jnp.float32)
    t1 = jax.random.normal(ks[4], (2, 4, 40, 40), jnp.float32)
    m1 = (jax.random.uniform(ks[5], (2, 4, 40, 40)) > 0.5).astype(jnp.int8)
    check(p1, t1, m1)

    # Chunked in-kernel fori_loop path, float mask + no-mask path.
    p2 = jax.random.normal(ks[6], (2, 4, 128, 128), jnp.float32)
    t2 = jax.random.normal(ks[7], (2, 4, 128, 128), jnp.float32)
    m2 = (jax.random.uniform(ks[8], (2, 4, 128, 128)) > 0.3).astype(jnp.float32)
    check(p2, t2, m2)
    check(p2, t2, None)

    print("KERNEL_OK")
</pallas_src>

<mosaic_0001>
module attributes {stable_mosaic.version = 11 : i64} {
  func.func @kernel(%arg0: i32, %arg1: memref<16x128xf32, #tpu.memory_space<vmem>>, %arg2: memref<16x128xf32, #tpu.memory_space<vmem>>, %arg3: memref<16x128xi8, #tpu.memory_space<vmem>>, %arg4: memref<1x1x128xf32, #tpu.memory_space<vmem>>, %arg5: memref<1x1x128xf32, #tpu.memory_space<vmem>>, %arg6: memref<1x1x128xf32, #tpu.memory_space<vmem>>) attributes {dimension_semantics = [#tpu.dimension_semantics<parallel>], iteration_bounds = array<i64: 1>, scalar_prefetch = 0 : i64, scratch_operands = 0 : i64, tpu.core_type = #tpu.core_type<tc>, window_params = [{transform_indices = @transform_0, window_bounds = array<i64: 16, 128>}, {transform_indices = @transform_1, window_bounds = array<i64: 16, 128>}, {transform_indices = @transform_2, window_bounds = array<i64: 16, 128>}, {transform_indices = @transform_3, window_bounds = array<i64: 1, 1, 128>}, {transform_indices = @transform_4, window_bounds = array<i64: 1, 1, 128>}, {transform_indices = @transform_5, window_bounds = array<i64: 1, 1, 128>}]} {
    %c0 = arith.constant 0 : index
    %c0_0 = arith.constant 0 : index
    %0 = vector.load %arg1[%c0, %c0_0] : memref<16x128xf32, #tpu.memory_space<vmem>>, vector<16x128xf32>
    %c0_1 = arith.constant 0 : index
    %c0_2 = arith.constant 0 : index
    %1 = vector.load %arg2[%c0_1, %c0_2] : memref<16x128xf32, #tpu.memory_space<vmem>>, vector<16x128xf32>
    %2 = arith.subf %0, %1 : vector<16x128xf32>
    %c0_3 = arith.constant 0 : index
    %c0_4 = arith.constant 0 : index
    %3 = vector.load %arg3[%c0_3, %c0_4] : memref<16x128xi8, #tpu.memory_space<vmem>>, vector<16x128xi8>
    %4 = arith.sitofp %3 : vector<16x128xi8> to vector<16x128xf32>
    %5 = arith.mulf %2, %4 : vector<16x128xf32>
    %6 = arith.mulf %2, %5 : vector<16x128xf32>
    %7 = vector.shape_cast %6 : vector<16x128xf32> to vector<2x8x128xf32>
    %cst = arith.constant dense<0.000000e+00> : vector<8x128xf32>
    %8 = vector.multi_reduction <add>, %7, %cst [0] : vector<2x8x128xf32> to vector<8x128xf32>
    %9 = math.absf %5 : vector<16x128xf32>
    %10 = vector.shape_cast %9 : vector<16x128xf32> to vector<2x8x128xf32>
    %cst_5 = arith.constant dense<0.000000e+00> : vector<8x128xf32>
    %11 = vector.multi_reduction <add>, %10, %cst_5 [0] : vector<2x8x128xf32> to vector<8x128xf32>
    %12 = vector.shape_cast %4 : vector<16x128xf32> to vector<2x8x128xf32>
    %cst_6 = arith.constant dense<0.000000e+00> : vector<8x128xf32>
    %13 = vector.multi_reduction <add>, %12, %cst_6 [0] : vector<2x8x128xf32> to vector<8x128xf32>
    %cst_7 = arith.constant dense<0.000000e+00> : vector<128xf32>
    %14 = vector.multi_reduction <add>, %8, %cst_7 [0] : vector<8x128xf32> to vector<128xf32>
    %15 = vector.shape_cast %14 : vector<128xf32> to vector<1x128xf32>
    %cst_8 = arith.constant dense<0.000000e+00> : vector<128xf32>
    %16 = vector.multi_reduction <add>, %11, %cst_8 [0] : vector<8x128xf32> to vector<128xf32>
    %17 = vector.shape_cast %16 : vector<128xf32> to vector<1x128xf32>
    %cst_9 = arith.constant dense<0.000000e+00> : vector<128xf32>
    %18 = vector.multi_reduction <add>, %13, %cst_9 [0] : vector<8x128xf32> to vector<128xf32>
    %19 = vector.shape_cast %18 : vector<128xf32> to vector<1x128xf32>
    %c0_10 = arith.constant 0 : index
    %c0_11 = arith.constant 0 : index
    %c0_12 = arith.constant 0 : index
    %20 = vector.load %arg4[%c0_10, %c0_11, %c0_12] : memref<1x1x128xf32, #tpu.memory_space<vmem>>, vector<1x1x128xf32>
    %21 = vector.shape_cast %20 : vector<1x1x128xf32> to vector<1x128xf32>
    %22 = vector.shape_cast %15 : vector<1x128xf32> to vector<1x1x128xf32>
    tpu.vector_store %arg4[%c0_10, %c0_11, %c0_12], %22 {strides = array<i32>} : memref<1x1x128xf32, #tpu.memory_space<vmem>>, vector<1x1x128xf32>,
    %c0_13 = arith.constant 0 : index
    %c0_14 = arith.constant 0 : index
    %c0_15 = arith.constant 0 : index
    %23 = vector.load %arg5[%c0_13, %c0_14, %c0_15] : memref<1x1x128xf32, #tpu.memory_space<vmem>>, vector<1x1x128xf32>
    %24 = vector.shape_cast %23 : vector<1x1x128xf32> to vector<1x128xf32>
    %25 = vector.shape_cast %17 : vector<1x128xf32> to vector<1x1x128xf32>
    tpu.vector_store %arg5[%c0_13, %c0_14, %c0_15], %25 {strides = array<i32>} : memref<1x1x128xf32, #tpu.memory_space<vmem>>, vector<1x1x128xf32>,
    %c0_16 = arith.constant 0 : index
    %c0_17 = arith.constant 0 : index
    %c0_18 = arith.constant 0 : index
    %26 = vector.load %arg6[%c0_16, %c0_17, %c0_18] : memref<1x1x128xf32, #tpu.memory_space<vmem>>, vector<1x1x128xf32>
    %27 = vector.shape_cast %26 : vector<1x1x128xf32> to vector<1x128xf32>
    %28 = vector.shape_cast %19 : vector<1x128xf32> to vector<1x1x128xf32>
    tpu.vector_store %arg6[%c0_16, %c0_17, %c0_18], %28 {strides = array<i32>} : memref<1x1x128xf32, #tpu.memory_space<vmem>>, vector<1x1x128xf32>,
    return
  }
  func.func @transform_0(%arg0: i32) -> (i32, i32) {
    %c0_i32 = arith.constant 0 : i32
    %c0_i32_0 = arith.constant 0 : i32
    return %arg0, %c0_i32 : i32, i32
  }
  func.func @transform_1(%arg0: i32) -> (i32, i32) {
    %c0_i32 = arith.constant 0 : i32
    %c0_i32_0 = arith.constant 0 : i32
    return %arg0, %c0_i32 : i32, i32
  }
  func.func @transform_2(%arg0: i32) -> (i32, i32) {
    %c0_i32 = arith.constant 0 : i32
    %c0_i32_0 = arith.constant 0 : i32
    return %arg0, %c0_i32 : i32, i32
  }
  func.func @transform_3(%arg0: i32) -> (i32, i32, i32) {
    %c0_i32 = arith.constant 0 : i32
    %c0_i32_0 = arith.constant 0 : i32
    %c0_i32_1 = arith.constant 0 : i32
    return %arg0, %c0_i32, %c0_i32_0 : i32, i32, i32
  }
  func.func @transform_4(%arg0: i32) -> (i32, i32, i32) {
    %c0_i32 = arith.constant 0 : i32
    %c0_i32_0 = arith.constant 0 : i32
    %c0_i32_1 = arith.constant 0 : i32
    return %arg0, %c0_i32, %c0_i32_0 : i32, i32, i32
  }
  func.func @transform_5(%arg0: i32) -> (i32, i32, i32) {
    %c0_i32 = arith.constant 0 : i32
    %c0_i32_0 = arith.constant 0 : i32
    %c0_i32_1 = arith.constant 0 : i32
    return %arg0, %c0_i32, %c0_i32_0 : i32, i32, i32
  }
}

</mosaic_0001>

<llo_original>
// kernel: _lambda_.1
$region0: #{_lambda_.1}
  #allocation0 [shape = 'u32[]', space=smem, size = 0x4, offset = 0x4, fixed_abs, tag = 'smem constant byte address 0x4 - core index']
  #allocation1 [shape = 'u32[144,128]{1,0:T(1,128)}', space=vmem, size = 0x12000, scoped, tag = 'internal scratch']
  %s0 = inlined_call_operand.vmem [shape: f32[16,128], index: 0, kind: input, shape index: {}]
  %s1 = inlined_call_operand.vmem [shape: f32[16,128], index: 1, kind: input, shape index: {}]
  %s2 = inlined_call_operand.vmem [shape: s8[16,128], index: 2, kind: input, shape index: {}]
  %s3 = inlined_call_operand.vmem [shape: f32[1,1,128], index: 3, kind: output, shape index: {0}]
  %s4 = inlined_call_operand.vmem [shape: f32[1,1,128], index: 4, kind: output, shape index: {1}]
  %s5 = inlined_call_operand.vmem [shape: f32[1,1,128], index: 5, kind: output, shape index: {2}]
  %6 = xla_tuple %s3, %s4, %s5
  %s7 = sld [smem:[#allocation0]]
  $region38: #{_lambda_.1} parent=0
    _
  %s9 = ssub.s32 1, %s7
  %s10 = scalar_select 0, %s9, %s7
  // Predicated region
  $region2: #{_lambda_.1} parent=0 // pred_check
    _
  $region3: #{_lambda_.1} parent=0 // pred_check_branch
    %12 = sbr.rel (0) target = $region5
  $region4: #{_lambda_.1} parent=0 // pred_region
    _
  $region5: #{_lambda_.1} parent=0 // pred_fallthru
    _
  // Predicated region
  $region6: #{_lambda_.1} parent=0 // pred_check
    _
  $region7: #{_lambda_.1} parent=0 // pred_check_branch
    %14 = sbr.rel (0) target = $region9
  $region8: #{_lambda_.1} parent=0 // pred_region
    _
  $region9: #{_lambda_.1} parent=0 // pred_fallthru
    _
  // Predicated region
  $region10: #{_lambda_.1} parent=0 // pred_check
    _
  $region11: #{_lambda_.1} parent=0 // pred_check_branch
    %16 = sbr.rel (0) target = $region13
  $region12: #{_lambda_.1} parent=0 // pred_region
    _
  $region13: #{_lambda_.1} parent=0 // pred_fallthru
    _
  %v17 = vld [vmem:[%s0] sm:$0xff]
  %v18 = vld [vmem:[%s0 + $0x8] sm:$0xff]
  %v19 = vld [vmem:[%s1] sm:$0xff]
  %v20 = vld [vmem:[%s1 + $0x8] sm:$0xff]
  %v21 = vsub.f32 %v17, %v19
  %v22 = vsub.f32 %v18, %v20
  %v23 = vld [vmem:[%s2] sm:$0x3]
  %v24 = vld [vmem:[%s2 + $0x2] sm:$0x3]
  %v25 = vunpack.c.0.s8 %v23
  %v26 = vunpack.c.0.s8 %v24
  %v27 = vcvt.s32.f32 %v25
  %v28 = vcvt.s32.f32 %v26
  %v29 = vmul.f32 %v21, %v27
  %v30 = vmul.f32 %v22, %v28
  %v31 = vmul.f32 %v21, %v29
  %v32 = vmul.f32 %v22, %v30
  %v33 = vadd.f32 %v31, %v32
  %v34 = vand.u32 2147483647, %v29
  %v35 = vand.u32 2147483647, %v30
  %v36 = vadd.f32 %v34, %v35
  %v37 = vadd.f32 %v27, %v28
  %v38 = vrot.slane %v33, 4
  %v39 = vadd.f32 %v33, %v38
  %v40 = vrot.slane %v39, 2
  %v41 = vadd.f32 %v39, %v40
  %v42 = vrot.slane %v41, 1
  %v43 = vadd.f32 %v41, %v42
  %v44 = vrot.slane %v36, 4
  %v45 = vadd.f32 %v36, %v44
  %v46 = vrot.slane %v45, 2
  %v47 = vadd.f32 %v45, %v46
  %v48 = vrot.slane %v47, 1
  %v49 = vadd.f32 %v47, %v48
  %v50 = vrot.slane %v37, 4
  %v51 = vadd.f32 %v37, %v50
  %v52 = vrot.slane %v51, 2
  %v53 = vadd.f32 %v51, %v52
  %v54 = vrot.slane %v53, 1
  %v55 = vadd.f32 %v53, %v54
  %56 = vst [vmem:[%s3] sm:$0x1] %v43
  %57 = vst [vmem:[%s4] sm:$0x1] %v49
  %58 = vst [vmem:[%s5] sm:$0x1] %v55
  // Predicated region
  $region14: #{_lambda_.1} parent=0 // pred_check
    _
  $region15: #{_lambda_.1} parent=0 // pred_check_branch
    %60 = sbr.rel (0) target = $region17
  $region16: #{_lambda_.1} parent=0 // pred_region
    _
  $region17: #{_lambda_.1} parent=0 // pred_fallthru
    _
  // Predicated region
  $region18: #{_lambda_.1} parent=0 // pred_check
    _
  $region19: #{_lambda_.1} parent=0 // pred_check_branch
    %62 = sbr.rel (0) target = $region21
  $region20: #{_lambda_.1} parent=0 // pred_region
    _
  $region21: #{_lambda_.1} parent=0 // pred_fallthru
    _
  // Predicated region
  $region22: #{_lambda_.1} parent=0 // pred_check
    _
  $region23: #{_lambda_.1} parent=0 // pred_check_branch
    %64 = sbr.rel (0) target = $region25
  $region24: #{_lambda_.1} parent=0 // pred_region
    _
  $region25: #{_lambda_.1} parent=0 // pred_fallthru
    _
  // Predicated region
  $region26: #{_lambda_.1} parent=0 // pred_check
    _
  $region27: #{_lambda_.1} parent=0 // pred_check_branch
    %66 = sbr.rel (0) target = $region29
  $region28: #{_lambda_.1} parent=0 // pred_region
    _
  $region29: #{_lambda_.1} parent=0 // pred_fallthru
    _
  // Predicated region
  $region30: #{_lambda_.1} parent=0 // pred_check
    _
  $region31: #{_lambda_.1} parent=0 // pred_check_branch
    %68 = sbr.rel (0) target = $region33
  $region32: #{_lambda_.1} parent=0 // pred_region
    _
  $region33: #{_lambda_.1} parent=0 // pred_fallthru
    _
  // Predicated region
  $region34: #{_lambda_.1} parent=0 // pred_check
    _
  $region35: #{_lambda_.1} parent=0 // pred_check_branch
    %70 = sbr.rel (0) target = $region37
  $region36: #{_lambda_.1} parent=0 // pred_region
    _
  $region37: #{_lambda_.1} parent=0 // pred_fallthru
    _

</llo_original>
